<compile_context>
chip_gen: v7x
topology: tpu7x:2x2x1
jax: 0.10.0
libtpu: 0.0.40
codegen_flags: <defaults>
</compile_context>

<pallas_src>
import jax
import jax.numpy as jnp
from jax.experimental import pallas as pl
from jax.experimental.pallas import tpu as pltpu


def _fused_tunnels_kernel(x_ref, w1_ref, b1_ref, w2_ref, b2_ref, o_ref):
    # x_ref : (3, H, TB) VMEM  — stacked [rule; data; sim], batch on lanes
    # w1_ref: (3,)  SMEM       — first Linear weights
    # b1_ref: (1,)  SMEM       — first Linear bias
    # w2_ref: (O, H) VMEM      — second Linear weights (PyTorch layout)
    # b2_ref: (O, 1) VMEM      — second Linear bias (column)
    # o_ref : (O, TB) VMEM     — lane-dense output tile
    # Hoist scalars out of the vector expression (read SMEM once per block).
    w_rule = w1_ref[0]
    w_data = w1_ref[1]
    w_sim = w1_ref[2]
    b1 = b1_ref[0]

    # First linear (3 -> 1): scalar-weighted elementwise combine on the VPU.
    h = (x_ref[0] * w_rule
         + x_ref[1] * w_data
         + x_ref[2] * w_sim
         + b1)                                            # (H, TB) f32

    # Second linear (H -> O) on the MXU: (O,H) @ (H,TB) -> (O,TB); N = TB is
    # large and lane-dense, so the matmul actually earns its fill/drain cost.
    o_ref[...] = (
        jnp.dot(w2_ref[...], h, preferred_element_type=jnp.float32)
        + b2_ref[...]
    )


def fused_tunnels_mlp_t(x_thb, w1, b1, w2, b2, *, tile_b=8192):
    """Lane-dense entry point (preferred hot path).

    x_thb : (3, H, B) f32  — stacked (rule, data, sim), batch on the lane axis.
    w1    : (3,) f32, b1: (1,) f32          first Linear (3 -> 1)
    w2    : (O, H) f32, b2: (O,) f32        second Linear (H -> O), torch layout
    Returns out_t : (O, B) f32.
    """
    _, H, B = x_thb.shape
    O = w2.shape[0]

    tb = int(min(tile_b, B))
    pad = (-B) % tb
    if pad:
        x_thb = jnp.pad(x_thb, ((0, 0), (0, 0), (0, pad)))
    Bp = B + pad

    b2_col = b2.reshape(O, 1)

    out_t = pl.pallas_call(
        _fused_tunnels_kernel,
        out_shape=jax.ShapeDtypeStruct((O, Bp), jnp.float32),
        grid=(Bp // tb,),
        in_specs=[
            # One contiguous DMA per batch tile for all three tunnels.
            pl.BlockSpec((3, H, tb), lambda i: (0, 0, i)),
            pl.BlockSpec(memory_space=pltpu.MemorySpace.SMEM),   # w1 (3,)
            pl.BlockSpec(memory_space=pltpu.MemorySpace.SMEM),   # b1 (1,)
            pl.BlockSpec((O, H), lambda i: (0, 0)),              # w2 replicated
            pl.BlockSpec((O, 1), lambda i: (0, 0)),              # b2 replicated
        ],
        out_specs=pl.BlockSpec((O, tb), lambda i: (0, i)),
        compiler_params=pltpu.CompilerParams(
            dimension_semantics=("parallel",),   # batch axis: megacore-shardable
        ),
    )(x_thb, w1, b1, w2, b2_col)

    if pad:
        out_t = out_t[:, :B]
    return out_t


def fused_tunnels_mlp(rule, data, sim, w1, b1, w2, b2, *, tile_b=8192):
    """Compatibility wrapper mirroring the PyTorch forward signature.

    rule/data/sim: (B, H) f32.  Returns (B, O) f32.
    NOTE: the stack + transpose below is XLA-side layout plumbing; for the hot
    path, produce the stacked (3, H, B) layout upstream and call
    fused_tunnels_mlp_t directly.
    """
    x_thb = jnp.transpose(jnp.stack((rule, data, sim), axis=0), (0, 2, 1))
    out_t = fused_tunnels_mlp_t(x_thb, w1, b1, w2, b2, tile_b=tile_b)
    return out_t.T


if __name__ == "__main__":
    B, H, O = 256, 16, 17   # hidden_size2=16, output_size2=17 (module defaults)
    TB = 128                # small demo batch tile -> exercises a 2-step grid

    key = jax.random.PRNGKey(0)
    k_x, k_w1, k_b1, k_w2, k_b2 = jax.random.split(key, 5)

    # Inputs produced directly in the kernel-preferred stacked (3, H, B) layout.
    x_thb = jax.random.normal(k_x, (3, H, B), dtype=jnp.float32)
    rule, data, sim = x_thb[0].T, x_thb[1].T, x_thb[2].T   # (B, H) views for ref

    # Deterministic parameter init (mimics nn.Linear uniform(-1/sqrt(fan_in), .)).
    w1 = jax.random.uniform(k_w1, (3,), jnp.float32,
                            minval=-1.0 / jnp.sqrt(3.0), maxval=1.0 / jnp.sqrt(3.0))
    b1 = jax.random.uniform(k_b1, (1,), jnp.float32,
                            minval=-1.0 / jnp.sqrt(3.0), maxval=1.0 / jnp.sqrt(3.0))
    w2 = jax.random.uniform(k_w2, (O, H), jnp.float32,
                            minval=-1.0 / jnp.sqrt(float(H)),
                            maxval=1.0 / jnp.sqrt(float(H)))
    b2 = jax.random.uniform(k_b2, (O,), jnp.float32,
                            minval=-1.0 / jnp.sqrt(float(H)),
                            maxval=1.0 / jnp.sqrt(float(H)))

    # Lane-dense hot path.
    out_t = fused_tunnels_mlp_t(x_thb, w1, b1, w2, b2, tile_b=TB)
    out_t = jax.block_until_ready(out_t)
    out = out_t.T                                          # (B, O)

    # Pure-JAX reference (same math as the PyTorch forward, B > 1).
    combined = jnp.stack((rule, data, sim), axis=2)        # (B, H, 3)
    h_ref = jnp.einsum("bhc,c->bh", combined, w1) + b1[0]  # (B, H)
    ref = h_ref @ w2.T + b2                                # (B, O)

    assert out.shape == (B, O)
    assert jnp.allclose(out, ref, atol=2e-5, rtol=2e-5)

    # Compatibility wrapper (PyTorch-shaped args) must agree too.
    out_compat = jax.block_until_ready(
        fused_tunnels_mlp(rule, data, sim, w1, b1, w2, b2, tile_b=TB))
    assert out_compat.shape == (B, O)
    assert jnp.allclose(out_compat, ref, atol=2e-5, rtol=2e-5)

    print("KERNEL_OK")
</pallas_src>

<mosaic_0001>
module attributes {stable_mosaic.version = 11 : i64} {
  func.func @_fused_tunnels_kernel(%arg0: i32, %arg1: memref<3x16x128xf32, #tpu.memory_space<vmem>>, %arg2: memref<3xf32, #tpu.memory_space<smem>>, %arg3: memref<1xf32, #tpu.memory_space<smem>>, %arg4: memref<17x16xf32, #tpu.memory_space<vmem>>, %arg5: memref<17x1xf32, #tpu.memory_space<vmem>>, %arg6: memref<17x128xf32, #tpu.memory_space<vmem>>) attributes {dimension_semantics = [#tpu.dimension_semantics<parallel>], iteration_bounds = array<i64: 2>, scalar_prefetch = 0 : i64, scratch_operands = 0 : i64, tpu.core_type = #tpu.core_type<tc>, window_params = [{transform_indices = @transform_0, window_bounds = array<i64: 3, 16, 128>}, {transform_indices = @transform_1, window_bounds = array<i64: 3>}, {transform_indices = @transform_2, window_bounds = array<i64: 1>}, {pipeline_mode = #tpu.pipeline_mode<synchronous>, transform_indices = @transform_3, window_bounds = array<i64: 17, 16>}, {pipeline_mode = #tpu.pipeline_mode<synchronous>, transform_indices = @transform_4, window_bounds = array<i64: 17, 1>}, {transform_indices = @transform_5, window_bounds = array<i64: 17, 128>}]} {
    %c0 = arith.constant 0 : index
    %0 = memref.load %arg2[%c0] : memref<3xf32, #tpu.memory_space<smem>>
    %c1 = arith.constant 1 : index
    %1 = memref.load %arg2[%c1] : memref<3xf32, #tpu.memory_space<smem>>
    %c2 = arith.constant 2 : index
    %2 = memref.load %arg2[%c2] : memref<3xf32, #tpu.memory_space<smem>>
    %c0_0 = arith.constant 0 : index
    %3 = memref.load %arg3[%c0_0] : memref<1xf32, #tpu.memory_space<smem>>
    %c0_1 = arith.constant 0 : index
    %c0_2 = arith.constant 0 : index
    %c0_3 = arith.constant 0 : index
    %4 = vector.load %arg1[%c0_1, %c0_2, %c0_3] : memref<3x16x128xf32, #tpu.memory_space<vmem>>, vector<1x16x128xf32>
    %5 = vector.shape_cast %4 : vector<1x16x128xf32> to vector<16x128xf32>
    %6 = vector.broadcast %0 : f32 to vector<16x128xf32>
    %7 = arith.mulf %5, %6 : vector<16x128xf32>
    %c1_4 = arith.constant 1 : index
    %c0_5 = arith.constant 0 : index
    %c0_6 = arith.constant 0 : index
    %8 = vector.load %arg1[%c1_4, %c0_5, %c0_6] : memref<3x16x128xf32, #tpu.memory_space<vmem>>, vector<1x16x128xf32>
    %9 = vector.shape_cast %8 : vector<1x16x128xf32> to vector<16x128xf32>
    %10 = vector.broadcast %1 : f32 to vector<16x128xf32>
    %11 = arith.mulf %9, %10 : vector<16x128xf32>
    %12 = arith.addf %7, %11 : vector<16x128xf32>
    %c2_7 = arith.constant 2 : index
    %c0_8 = arith.constant 0 : index
    %c0_9 = arith.constant 0 : index
    %13 = vector.load %arg1[%c2_7, %c0_8, %c0_9] : memref<3x16x128xf32, #tpu.memory_space<vmem>>, vector<1x16x128xf32>
    %14 = vector.shape_cast %13 : vector<1x16x128xf32> to vector<16x128xf32>
    %15 = vector.broadcast %2 : f32 to vector<16x128xf32>
    %16 = arith.mulf %14, %15 : vector<16x128xf32>
    %17 = arith.addf %12, %16 : vector<16x128xf32>
    %18 = vector.broadcast %3 : f32 to vector<16x128xf32>
    %19 = arith.addf %17, %18 : vector<16x128xf32>
    %c0_10 = arith.constant 0 : index
    %c0_11 = arith.constant 0 : index
    %20 = vector.load %arg4[%c0_10, %c0_11] : memref<17x16xf32, #tpu.memory_space<vmem>>, vector<17x16xf32>
    %cst = arith.constant dense<0.000000e+00> : vector<17x128xf32>
    %21 = tpu.matmul %20, %19, %cst {dimension_numbers = #tpu.dot_dimension_numbers<[1], [0], [0], [1], [0, 0, 1, 1], [], []>} : vector<17x16xf32>, vector<16x128xf32>, vector<17x128xf32> -> vector<17x128xf32>
    %c0_12 = arith.constant 0 : index
    %c0_13 = arith.constant 0 : index
    %22 = vector.load %arg5[%c0_12, %c0_13] : memref<17x1xf32, #tpu.memory_space<vmem>>, vector<17x1xf32>
    %23 = vector.broadcast %22 : vector<17x1xf32> to vector<17x128xf32>
    %24 = arith.addf %21, %23 : vector<17x128xf32>
    %c0_14 = arith.constant 0 : index
    %c0_15 = arith.constant 0 : index
    %25 = vector.load %arg6[%c0_14, %c0_15] : memref<17x128xf32, #tpu.memory_space<vmem>>, vector<17x128xf32>
    tpu.vector_store %arg6[%c0_14, %c0_15], %24 {strides = array<i32>} : memref<17x128xf32, #tpu.memory_space<vmem>>, vector<17x128xf32>,
    return
  }
  func.func @transform_0(%arg0: i32) -> (i32, i32, i32) {
    %c0_i32 = arith.constant 0 : i32
    %c0_i32_0 = arith.constant 0 : i32
    %c0_i32_1 = arith.constant 0 : i32
    return %c0_i32, %c0_i32_0, %arg0 : i32, i32, i32
  }
  func.func @transform_1(%arg0: i32) -> i32 {
    %c0_i32 = arith.constant 0 : i32
    %c0_i32_0 = arith.constant 0 : i32
    return %c0_i32 : i32
  }
  func.func @transform_2(%arg0: i32) -> i32 {
    %c0_i32 = arith.constant 0 : i32
    %c0_i32_0 = arith.constant 0 : i32
    return %c0_i32 : i32
  }
  func.func @transform_3(%arg0: i32) -> (i32, i32) {
    %c0_i32 = arith.constant 0 : i32
    %c0_i32_0 = arith.constant 0 : i32
    %c0_i32_1 = arith.constant 0 : i32
    return %c0_i32, %c0_i32_0 : i32, i32
  }
  func.func @transform_4(%arg0: i32) -> (i32, i32) {
    %c0_i32 = arith.constant 0 : i32
    %c0_i32_0 = arith.constant 0 : i32
    %c0_i32_1 = arith.constant 0 : i32
    return %c0_i32, %c0_i32_0 : i32, i32
  }
  func.func @transform_5(%arg0: i32) -> (i32, i32) {
    %c0_i32 = arith.constant 0 : i32
    %c0_i32_0 = arith.constant 0 : i32
    return %c0_i32, %arg0 : i32, i32
  }
}

</mosaic_0001>

<llo_original>
// kernel: tpu_custom_call.1
$region0: #{tpu_custom_call.1}
  #allocation0 [shape = 'u32[]', space=smem, size = 0x4, offset = 0x4, fixed_abs, tag = 'smem constant byte address 0x4 - core index']
  #allocation1 [shape = 'u32[144,128]{1,0:T(1,128)}', space=vmem, size = 0x12000, scoped, tag = 'internal scratch']
  #allocation2 [shape = 'f32[1]{0:T(128)S(6)}', space=smem, size = 0x200, scoped, tag = 'scoped memory for tpu_custom_call.1']
  %s0 = inlined_call_operand.hbm [shape: f32[3,16,256], index: 0, kind: input, shape index: {}]
  %s1 = inlined_call_operand.vmem [shape: f32[3], index: 1, kind: input, shape index: {}]
  %s2 = inlined_call_operand.<no memory space> [shape: f32[1], index: 2, kind: input, shape index: {}]
  %s3 = inlined_call_operand.vmem [shape: f32[17,16], index: 3, kind: input, shape index: {}]
  %s4 = inlined_call_operand.vmem [shape: f32[17,1], index: 4, kind: input, shape index: {}]
  %s5 = inlined_call_operand.hbm [shape: f32[17,256], index: 5, kind: output, shape index: {}]
  %s6 = sld [smem:[#allocation0]]
  $region61: #{tpu_custom_call.1} parent=0
    _
  %s8 = ssub.s32 1, %s6
  %s9 = scalar_select 0, %s8, %s6
  %10 = sst [smem:[#allocation2]] %s2
  $region1: #{tpu_custom_call.1} parent=0
    #allocation3 [shape = 'u8[49152]{0}', space=vmem, size = 0xc000, scoped, tag = 'input window, operand 0']
    #allocation4 [shape = 's32[2]{0}', space=sflag, size = 0x8, scoped, tag = 'scoped memory for tpu_custom_call.1']
    #allocation5 [shape = 's32[2]{0}', space=sflag, size = 0x8, scoped, tag = 'scoped memory for tpu_custom_call.1']
    #allocation6 [shape = 's32[2]{0}', space=sflag, size = 0x8, scoped, tag = 'scoped memory for tpu_custom_call.1']
    #allocation7 [shape = 'u8[512]{0}', space=smem, size = 0x200, scoped, tag = 'input window, operand 1, single buffered']
    #allocation8 [shape = 'u8[24576]{0}', space=vmem, size = 0x6000, scoped, tag = 'output window, operand 0']
    %11 = vsyncpa [#allocation4], 0
    %s12 = scalar_lea.sflag [#allocation4], 1
    %13 = vsyncpa %s12, 0
    %14 = vsyncpa [#allocation6], 0
    %15 = vsyncpa [#allocation5], 0
    %s16 = scalar_lea.sflag [#allocation5], 1
    %17 = vsyncpa %s16, 0
    loop: start=0, step=1, limit=4
    $region2: #{tpu_custom_call.1} parent=1 // loop_pre_header
      _
    $region3: #{tpu_custom_call.1} parent=1 // loop_header
      %s19 = sphi 0, %s23
      %p20 = scmp.ge.s32.totalorder %s19, 4
      %s29 = sphi 0, %s31
      %s32 = sphi 0, %s29
      %s33 = sphi 0, %s32
      %s49 = sphi 0, %s33
      %s53 = sphi 0, %s53
      %s55 = sphi 0, %s53
      %s56 = sphi 0, %s55
      %s70 = sphi 0, %s56
      %s74 = sphi 0, %s74
      %s76 = sphi 0, %s74
      %s77 = sphi 0, %s76
      %s91 = sphi 0, %s77
      %s95 = sphi 0, %s95
      %s97 = sphi 0, %s95
      %s98 = sphi 0, %s97
      %s112 = sphi 0, %s98
      %s116 = sphi 0, %s116
      %s118 = sphi 0, %s116
      %s119 = sphi 0, %s118
      %s133 = sphi 0, %s119
      %s139 = sphi 0, %s141
      %s142 = sphi 0, %s139
      %s143 = sphi 0, %s142
      %s159 = sphi 0, %s143
    $region4: #{tpu_custom_call.1} parent=1 // loop_header_branch
      %22 = sbr.rel (%p20) target = $region8
    $region5: #{tpu_custom_call.1} parent=1 // loop_body
      %s24 = ssub.s32 %s19, 1
      %s25 = ssub.s32 %s19, 2
      %s26 = sadd.s32 %s19, 1
      %s27 = ssub.s32 %s19, %s26
      %p28 = scmp.eq.s32.totalorder %s27, 0
      %s30 = sadd.s32 %s29, 1
      %s31 = scalar_select %p28, %s29, %s30
      %p34 = pneg %p28
      %p35 = scmp.eq.s32.totalorder %s19, 1
      %p36 = por %p34, %p35
      %p37 = scmp.ne.s32.totalorder %s29, %s32
      %p38 = scmp.eq.s32.totalorder %s19, 0
      %p39 = por %p37, %p38
      %p40 = scmp.ne.s32.totalorder %s29, %s32
      %p41 = scmp.eq.s32.totalorder %s24, 1
      %p42 = por %p40, %p41
      %p43 = scmp.ne.s32.totalorder %s32, %s33
      %p44 = scmp.eq.s32.totalorder %s24, 0
      %p45 = por %p43, %p44
      %p46 = scmp.ne.s32.totalorder %s32, %s33
      %p47 = scmp.eq.s32.totalorder %s25, 1
      %p48 = por %p46, %p47
      %p50 = scmp.ne.s32.totalorder %s33, %s49
      %p51 = scmp.eq.s32.totalorder %s25, 0
      %p52 = por %p50, %p51
      %s54 = sadd.s32 %s53, 1
      %p57 = scmp.eq.s32.totalorder %s19, 1
      %p58 = scmp.ne.s32.totalorder %s53, %s55
      %p59 = scmp.eq.s32.totalorder %s19, 0
      %p60 = por %p58, %p59
      %p61 = scmp.ne.s32.totalorder %s53, %s55
      %p62 = scmp.eq.s32.totalorder %s24, 1
      %p63 = por %p61, %p62
      %p64 = scmp.ne.s32.totalorder %s55, %s56
      %p65 = scmp.eq.s32.totalorder %s24, 0
      %p66 = por %p64, %p65
      %p67 = scmp.ne.s32.totalorder %s55, %s56
      %p68 = scmp.eq.s32.totalorder %s25, 1
      %p69 = por %p67, %p68
      %p71 = scmp.ne.s32.totalorder %s56, %s70
      %p72 = scmp.eq.s32.totalorder %s25, 0
      %p73 = por %p71, %p72
      %s75 = sadd.s32 %s74, 1
      %p78 = scmp.eq.s32.totalorder %s19, 1
      %p79 = scmp.ne.s32.totalorder %s74, %s76
      %p80 = scmp.eq.s32.totalorder %s19, 0
      %p81 = por %p79, %p80
      %p82 = scmp.ne.s32.totalorder %s74, %s76
      %p83 = scmp.eq.s32.totalorder %s24, 1
      %p84 = por %p82, %p83
      %p85 = scmp.ne.s32.totalorder %s76, %s77
      %p86 = scmp.eq.s32.totalorder %s24, 0
      %p87 = por %p85, %p86
      %p88 = scmp.ne.s32.totalorder %s76, %s77
      %p89 = scmp.eq.s32.totalorder %s25, 1
      %p90 = por %p88, %p89
      %p92 = scmp.ne.s32.totalorder %s77, %s91
      %p93 = scmp.eq.s32.totalorder %s25, 0
      %p94 = por %p92, %p93
      %s96 = sadd.s32 %s95, 1
      %p99 = scmp.eq.s32.totalorder %s19, 1
      %p100 = scmp.ne.s32.totalorder %s95, %s97
      %p101 = scmp.eq.s32.totalorder %s19, 0
      %p102 = por %p100, %p101
      %p103 = scmp.ne.s32.totalorder %s95, %s97
      %p104 = scmp.eq.s32.totalorder %s24, 1
      %p105 = por %p103, %p104
      %p106 = scmp.ne.s32.totalorder %s97, %s98
      %p107 = scmp.eq.s32.totalorder %s24, 0
      %p108 = por %p106, %p107
      %p109 = scmp.ne.s32.totalorder %s97, %s98
      %p110 = scmp.eq.s32.totalorder %s25, 1
      %p111 = por %p109, %p110
      %p113 = scmp.ne.s32.totalorder %s98, %s112
      %p114 = scmp.eq.s32.totalorder %s25, 0
      %p115 = por %p113, %p114
      %s117 = sadd.s32 %s116, 1
      %p120 = scmp.eq.s32.totalorder %s19, 1
      %p121 = scmp.ne.s32.totalorder %s116, %s118
      %p122 = scmp.eq.s32.totalorder %s19, 0
      %p123 = por %p121, %p122
      %p124 = scmp.ne.s32.totalorder %s116, %s118
      %p125 = scmp.eq.s32.totalorder %s24, 1
      %p126 = por %p124, %p125
      %p127 = scmp.ne.s32.totalorder %s118, %s119
      %p128 = scmp.eq.s32.totalorder %s24, 0
      %p129 = por %p127, %p128
      %p130 = scmp.ne.s32.totalorder %s118, %s119
      %p131 = scmp.eq.s32.totalorder %s25, 1
      %p132 = por %p130, %p131
      %p134 = scmp.ne.s32.totalorder %s119, %s133
      %p135 = scmp.eq.s32.totalorder %s25, 0
      %p136 = por %p134, %p135
      %s137 = ssub.s32 %s19, %s26
      %p138 = scmp.eq.s32.totalorder %s137, 0
      %s140 = sadd.s32 %s139, 1
      %s141 = scalar_select %p138, %s139, %s140
      %p144 = pneg %p138
      %p145 = scmp.eq.s32.totalorder %s19, 1
      %p146 = por %p144, %p145
      %p147 = scmp.ne.s32.totalorder %s139, %s142
      %p148 = scmp.eq.s32.totalorder %s19, 0
      %p149 = por %p147, %p148
      %p150 = scmp.ne.s32.totalorder %s139, %s142
      %p151 = scmp.eq.s32.totalorder %s24, 1
      %p152 = por %p150, %p151
      %p153 = scmp.ne.s32.totalorder %s142, %s143
      %p154 = scmp.eq.s32.totalorder %s24, 0
      %p155 = por %p153, %p154
      %p156 = scmp.ne.s32.totalorder %s142, %s143
      %p157 = scmp.eq.s32.totalorder %s25, 1
      %p158 = por %p156, %p157
      %p160 = scmp.ne.s32.totalorder %s143, %s159
      %p161 = scmp.eq.s32.totalorder %s25, 0
      %p162 = por %p160, %p161
      %p163 = scmp.le.s32.totalorder 1, %s19
      %p164 = scmp.lt.s32.totalorder %s19, 3
      %p165 = pnand %p163, %p164
      %p166 = pneg %p165
      // Predicated region
      $region9: #{tpu_custom_call.1} parent=5 // pred_check
        _
      $region10: #{tpu_custom_call.1} parent=5 // pred_check_branch
        %168 = sbr.rel (%p165) target = $region12
      $region11: #{tpu_custom_call.1} parent=5 // pred_region
        %s169 = ssub.s32 %s19, 1
        // Predicated region
        $region13: #{tpu_custom_call.1} parent=11 // pred_check
          %p170 = pneg %p66
        $region14: #{tpu_custom_call.1} parent=11 // pred_check_branch
          %172 = sbr.rel (%p170) target = $region16
        $region15: #{tpu_custom_call.1} parent=11 // pred_region
          %s174 = ssub.s32 16, 16
          %175 = vsyncadd [#allocation6], %s174
          %s177 = sshll.u32 %s1, 4
          %s178 = int_to_ptr.vmem [resolvable:$true] %s177
          %180 = dma.vmem_to_smem %s178, 16, [#allocation7], [#allocation6]
        $region16: #{tpu_custom_call.1} parent=11 // pred_fallthru
          _
        // Predicated region
        $region17: #{tpu_custom_call.1} parent=11 // pred_check
          %p181 = pneg %p87
        $region18: #{tpu_custom_call.1} parent=11 // pred_check_branch
          %183 = sbr.rel (%p181) target = $region20
        $region19: #{tpu_custom_call.1} parent=11 // pred_region
          _
        $region20: #{tpu_custom_call.1} parent=11 // pred_fallthru
          _
        // Predicated region
        $region21: #{tpu_custom_call.1} parent=11 // pred_check
          %p184 = pneg %p108
        $region22: #{tpu_custom_call.1} parent=11 // pred_check_branch
          %186 = sbr.rel (%p184) target = $region24
        $region23: #{tpu_custom_call.1} parent=11 // pred_region
          _
        $region24: #{tpu_custom_call.1} parent=11 // pred_fallthru
          _
        // Predicated region
        $region25: #{tpu_custom_call.1} parent=11 // pred_check
          %p187 = pneg %p129
        $region26: #{tpu_custom_call.1} parent=11 // pred_check_branch
          %189 = sbr.rel (%p187) target = $region28
        $region27: #{tpu_custom_call.1} parent=11 // pred_region
          _
        $region28: #{tpu_custom_call.1} parent=11 // pred_fallthru
          _
      $region12: #{tpu_custom_call.1} parent=5 // pred_fallthru
        _
      %p190 = scmp.lt.s32.totalorder %s19, 2
      // Predicated region
      $region29: #{tpu_custom_call.1} parent=5 // pred_check
        %p191 = pneg %p190
      $region30: #{tpu_custom_call.1} parent=5 // pred_check_branch
        %193 = sbr.rel (%p191) target = $region32
      $region31: #{tpu_custom_call.1} parent=5 // pred_region
        // Predicated region
        $region33: #{tpu_custom_call.1} parent=31 // pred_check
          %p194 = pneg %p39
        $region34: #{tpu_custom_call.1} parent=31 // pred_check_branch
          %196 = sbr.rel (%p194) target = $region36
        $region35: #{tpu_custom_call.1} parent=31 // pred_region
          %s197 = sand.u32 %s29, 1
          %s198 = scalar_lea.sflag [#allocation4], %s197
          %s199 = sand.u32 %s29, 1
          %s200 = smul.addr %s199, 48
          %s201 = scalar_lea.vmem [#allocation3], %s200
          %s203 = ssub.s32 768, 768
          %204 = vsyncadd %s198, %s203
          %s205 = smul.addr %s19, 128
          %s206 = scalar_lea.hbm %s0, %s205
          %s207 = sshll.u32 %s201, 4
          %s208 = int_to_ptr.vmem [resolvable:$true] %s207
          %213 = dma.hbm_to_vmem [thread:$0]  %s206, 768, %s208, %s198, 256, 128, 8
        $region36: #{tpu_custom_call.1} parent=31 // pred_fallthru
          _
      $region32: #{tpu_custom_call.1} parent=5 // pred_fallthru
        _
      %p214 = scmp.le.s32.totalorder 1, %s19
      %p215 = scmp.lt.s32.totalorder %s19, 3
      %p216 = pnand %p214, %p215
      %p217 = pneg %p216
      // Predicated region
      $region37: #{tpu_custom_call.1} parent=5 // pred_check
        _
      $region38: #{tpu_custom_call.1} parent=5 // pred_check_branch
        %219 = sbr.rel (%p216) target = $region40
      $region39: #{tpu_custom_call.1} parent=5 // pred_region
        %s220 = ssub.s32 %s19, 1
        %s221 = sand.u32 %s32, 1
        %s222 = scalar_lea.sflag [#allocation4], %s221
        %s223 = sand.u32 %s32, 1
        %s224 = smul.addr %s223, 48
        %s225 = scalar_lea.vmem [#allocation3], %s224
        // Predicated region
        $region41: #{tpu_custom_call.1} parent=39 // pred_check
          %p226 = pneg %p45
        $region42: #{tpu_custom_call.1} parent=39 // pred_check_branch
          %228 = sbr.rel (%p226) target = $region44
        $region43: #{tpu_custom_call.1} parent=39 // pred_region
          %229 = dma.done %s222, 768
        $region44: #{tpu_custom_call.1} parent=39 // pred_fallthru
          _
        // Predicated region
        $region45: #{tpu_custom_call.1} parent=39 // pred_check
          %p230 = pneg %p66
        $region46: #{tpu_custom_call.1} parent=39 // pred_check_branch
          %232 = sbr.rel (%p230) target = $region48
        $region47: #{tpu_custom_call.1} parent=39 // pred_region
          %233 = dma.done [#allocation6], 16
        $region48: #{tpu_custom_call.1} parent=39 // pred_fallthru
          _
        %234 = sfence
        %s235 = sand.u32 %s32, 1
        %s236 = scalar_lea.sflag [#allocation4], %s235
        %s237 = sand.u32 %s32, 1
        %s238 = smul.addr %s237, 48
        %s239 = scalar_lea.vmem [#allocation3], %s238
        %p240 = pneg %p45
        %p241 = pneg %p42
        %p242 = pneg %p66
        %p243 = pneg %p63
        %p244 = pneg %p87
        %p245 = pneg %p84
        %p246 = pneg %p108
        %p247 = pneg %p105
        %p248 = pneg %p129
        %p249 = pneg %p126
        %p250 = pneg %p155
        %p251 = pneg %p152
        %s252 = sand.u32 %s142, 1
        %s253 = scalar_lea.sflag [#allocation5], %s252
        %s254 = sand.u32 %s142, 1
        %s255 = smul.addr %s254, 24
        %s256 = scalar_lea.vmem [#allocation8], %s255
        %s257 = sld [smem:[#allocation7]]
        %s258 = sld [smem:[#allocation7 + $0x1]]
        %s259 = sld [smem:[#allocation7 + $0x2]]
        %s260 = sld [smem:[#allocation2]]
        %v261 = vld [vmem:[%s225] sm:$0xff]
        %v262 = vld [vmem:[%s225 + $0x8] sm:$0xff]
        %v263 = vstv %s257
        %v264 = vmul.f32 %v261, %v263
        %v265 = vmul.f32 %v262, %v263
        %s266 = scalar_lea.vmem %s225, 16 [#allocation3]
        %v267 = vld [vmem:[%s266] sm:$0xff]
        %v268 = vld [vmem:[%s266 + $0x8] sm:$0xff]
        %v269 = vstv %s258
        %v270 = vmul.f32 %v267, %v269
        %v271 = vmul.f32 %v268, %v269
        %v272 = vadd.f32 %v264, %v270
        %v273 = vadd.f32 %v265, %v271
        %s274 = scalar_lea.vmem %s225, 32 [#allocation3]
        %v275 = vld [vmem:[%s274] sm:$0xff]
        %v276 = vld [vmem:[%s274 + $0x8] sm:$0xff]
        %v277 = vstv %s259
        %v278 = vmul.f32 %v275, %v277
        %v279 = vmul.f32 %v276, %v277
        %v280 = vadd.f32 %v272, %v278
        %v281 = vadd.f32 %v273, %v279
        %v282 = vstv %s260
        %v283 = vadd.f32 %v280, %v282
        %v284 = vadd.f32 %v281, %v282
        %v285 = vld [vmem:[%s3] sm:$0xff]
        %v286 = vld [vmem:[%s3 + $0x8] sm:$0xff]
        %v287 = vld [vmem:[%s3 + $0x10] sm:$0x1]
        %v288 = vld [vmem:[%s4] sm:$0xff]
        %v289 = vld [vmem:[%s4 + $0x8] sm:$0xff]
        %v290 = vld [vmem:[%s4 + $0x10] sm:$0x1]
        %292 = vset.pattern.permute.xlu0 0
        %293 = vperm.xlu0 %292, %v288
        %v294 = vpop.permute.xlu0 %293
        %297 = vset.pattern.permute.xlu0 0
        %298 = vperm.xlu0 %297, %v289
        %v299 = vpop.permute.xlu0 %298
        %302 = vset.pattern.permute.xlu0 0
        %303 = vperm.xlu0 %302, %v290
        %v304 = vpop.permute.xlu0 %303
        %vm306 = vcmask 130048
        %v308 = vsel %vm306, %v285, 0
        %v311 = vsel %vm306, %v286, 0
        %v314 = vsel %vm306, %v287, 0
        %316 = vmatprep.subr.mxu0 0.0
        %317 = vmatpush1.msra.mxu0 %v283
        %318 = vmatprep.subr.mxu0 0.0
        %319 = vmatpush1.msra.mxu0 %v284
        %320 = vmatprep.subr.mxu0 0.0
        %321 = vmatpush1.msra.mxu0 0.0
        %322 = vmatprep.subr.mxu0 0.0
        %323 = vmatpush1.msra.mxu0 0.0
        %324 = vmatprep.subr.mxu0 0.0
        %325 = vmatpush1.msra.mxu0 0.0
        %326 = vmatprep.subr.mxu0 0.0
        %327 = vmatpush1.msra.mxu0 0.0
        %328 = vmatprep.subr.mxu0 0.0
        %329 = vmatpush1.msra.mxu0 0.0
        %330 = vmatprep.subr.mxu0 0.0
        %331 = vmatpush1.msra.mxu0 0.0
        %332 = vmatprep.subr.mxu0 0.0
        %333 = vmatpush1.msra.mxu0 0.0
        %334 = vmatprep.subr.mxu0 0.0
        %335 = vmatpush1.msra.mxu0 0.0
        %336 = vmatprep.subr.mxu0 0.0
        %337 = vmatpush1.msra.mxu0 0.0
        %338 = vmatprep.subr.mxu0 0.0
        %339 = vmatpush1.msra.mxu0 0.0
        %340 = vmatprep.subr.mxu0 0.0
        %341 = vmatpush1.msra.mxu0 0.0
        %342 = vmatprep.subr.mxu0 0.0
        %343 = vmatpush1.msra.mxu0 0.0
        %344 = vmatprep.subr.mxu0 0.0
        %345 = vmatpush1.msra.mxu0 0.0
        %346 = vmatprep.subr.mxu0 0.0
        %347 = vmatpush1.msra.mxu0 0.0
        %348 = vmatprep.subr.mxu0 0.0
        %349 = vmatpush1.msra.mxu0 0.0
        %350 = vmatprep.subr.mxu0 0.0
        %351 = vmatpush1.msra.mxu0 0.0
        %352 = vmatprep.subr.mxu0 0.0
        %353 = vmatpush1.msra.mxu0 0.0
        %354 = vmatprep.subr.mxu0 0.0
        %355 = vmatpush1.msra.mxu0 0.0
        %356 = vmatprep.subr.mxu0 0.0
        %357 = vmatpush1.msra.mxu0 0.0
        %358 = vmatprep.subr.mxu0 0.0
        %359 = vmatpush1.msra.mxu0 0.0
        %360 = vmatprep.subr.mxu0 0.0
        %361 = vmatpush1.msra.mxu0 0.0
        %362 = vmatprep.subr.mxu0 0.0
        %363 = vmatpush1.msra.mxu0 0.0
        %364 = vmatprep.subr.mxu0 0.0
        %365 = vmatpush1.msra.mxu0 0.0
        %366 = vmatprep.subr.mxu0 0.0
        %367 = vmatpush1.msra.mxu0 0.0
        %368 = vmatprep.subr.mxu0 0.0
        %369 = vmatpush1.msra.mxu0 0.0
        %370 = vmatprep.subr.mxu0 0.0
        %371 = vmatpush1.msra.mxu0 0.0
        %372 = vmatprep.subr.mxu0 0.0
        %373 = vmatpush1.msra.mxu0 0.0
        %374 = vmatprep.subr.mxu0 0.0
        %375 = vmatpush1.msra.mxu0 0.0
        %376 = vmatprep.subr.mxu0 0.0
        %377 = vmatpush1.msra.mxu0 0.0
        %378 = vmatprep.subr.mxu0 0.0
        %379 = vmatpush1.msra.mxu0 0.0
        %380 = vmatprep.mubr.f32.mxu0 0.0
        %381 = vmatmul.mubr.f32.gmra.mrb[0].mxu0 %v308
        %v382 = vpop.f32.mrb[0].mxu0
        %v383 = vadd.f32 %v294, %v382
        %v384 = vpop.f32.mrb[0].mxu0
        %385 = vmatprep.mubr.f32.mxu0 0.0
        %386 = vmatmul.mubr.f32.gmra.mrb[0].mxu0 %v311
        %v387 = vpop.f32.mrb[0].mxu0
        %v388 = vadd.f32 %v299, %v387
        %v389 = vpop.f32.mrb[0].mxu0
        %390 = vmatprep.mubr.f32.mxu0 0.0
        %391 = vmatmul.mubr.f32.gmra.mrb[0].mxu0 %v314
        %v392 = vpop.f32.mrb[0].mxu0
        %v393 = vadd.f32 %v304, %v392
        %v394 = vpop.f32.mrb[0].mxu0
        %395 = vdwg.mxu0
        %396 = vst [vmem:[%s256] sm:$0xff] %v383
        %397 = vst [vmem:[%s256 + $0x8] sm:$0xff] %v388
        %398 = vst [vmem:[%s256 + $0x10] sm:$0x1] %v393
        %s399 = sand.u32 %s142, 1
        %s400 = scalar_lea.sflag [#allocation5], %s399
        %s401 = sand.u32 %s142, 1
        %s402 = smul.addr %s401, 24
        %s403 = scalar_lea.vmem [#allocation8], %s402
        // Predicated region
        $region49: #{tpu_custom_call.1} parent=39 // pred_check
          %p404 = pneg %p152
        $region50: #{tpu_custom_call.1} parent=39 // pred_check_branch
          %406 = sbr.rel (%p404) target = $region52
        $region51: #{tpu_custom_call.1} parent=39 // pred_region
          %s408 = ssub.s32 384, 384
          %409 = vsyncadd %s400, %s408
          %s410 = smul.addr %s24, 128
          %s411 = scalar_lea.hbm %s5, %s410
          %s412 = sshll.u32 %s403, 4
          %s413 = int_to_ptr.vmem [resolvable:$true] %s412
          %418 = dma.vmem_to_hbm [thread:$0]  %s413, 384, %s411, %s400, 128, 256, 8
        $region52: #{tpu_custom_call.1} parent=39 // pred_fallthru
          _
      $region40: #{tpu_custom_call.1} parent=5 // pred_fallthru
        _
      %p419 = scmp.le.s32.totalorder 2, %s19
      // Predicated region
      $region53: #{tpu_custom_call.1} parent=5 // pred_check
        %p420 = pneg %p419
      $region54: #{tpu_custom_call.1} parent=5 // pred_check_branch
        %422 = sbr.rel (%p420) target = $region56
      $region55: #{tpu_custom_call.1} parent=5 // pred_region
        %s423 = ssub.s32 %s19, 2
        // Predicated region
        $region57: #{tpu_custom_call.1} parent=55 // pred_check
          %p424 = pneg %p158
        $region58: #{tpu_custom_call.1} parent=55 // pred_check_branch
          %426 = sbr.rel (%p424) target = $region60
        $region59: #{tpu_custom_call.1} parent=55 // pred_region
          %s427 = sand.u32 %s143, 1
          %s428 = scalar_lea.sflag [#allocation5], %s427
          %s429 = sand.u32 %s143, 1
          %s430 = smul.addr %s429, 24
          %s431 = scalar_lea.vmem [#allocation8], %s430
          %432 = dma.done %s428, 384
        $region60: #{tpu_custom_call.1} parent=55 // pred_fallthru
          _
      $region56: #{tpu_custom_call.1} parent=5 // pred_fallthru
        _
    $region6: #{tpu_custom_call.1} parent=1 // loop_footer
      %s23 = sadd.s32 1, %s19
    $region7: #{tpu_custom_call.1} parent=1 // loop_footer_branch
      %18 = sbr.rel target = $region3
    $region8: #{tpu_custom_call.1} parent=1 // loop_exit
      _
    %433 = vsyncpa [#allocation4], 1
    %s434 = scalar_lea.sflag [#allocation4], 1
    %435 = vsyncpa %s434, 1
    %436 = vsyncpa [#allocation5], 1
    %s437 = scalar_lea.sflag [#allocation5], 1
    %438 = vsyncpa %s437, 1
    %439 = vsyncpa [#allocation6], 1
    %s440 = scalar_lea.sflag [#allocation6], 1
    %441 = vsyncpa %s440, 1

</llo_original>
